<compile_context>
chip_gen: v7x
topology: tpu7x:2x2x1
jax: 0.10.0
libtpu: 0.0.40
codegen_flags: <defaults>
</compile_context>

<pallas_src>
import functools

import jax
import jax.numpy as jnp
from jax import lax
from jax.experimental import pallas as pl
from jax.experimental.pallas import tpu as pltpu


def mlp_kernel(x_ref, wk_ref, w3_ref, o_ref, *, ch):
    # x_ref : [8, TB]   packed, transposed inputs (batch on lanes)
    # wk_ref: [8, 16]   packed params: cols 0-7 rows 0-4 = w1[out,in];
    #                   col 8 rows 0-4 = b1; col 9 rows 0-4 = w2; col 10 row 0 = b2
    # w3_ref: [size, 2] col 0 = w3 (out, in=1), col 1 = b3
    # o_ref : [size, TB]
    tb = x_ref.shape[1]
    n_chunks = tb // ch

    # Hoist the tiny weight slices out of the chunk loop (loop-invariant loads).
    w1c = [wk_ref[0:5, k:k + 1] for k in range(8)]   # eight [5,1] columns of w1
    b1 = wk_ref[0:5, 8:9]                            # [5,1]
    w2 = wk_ref[0:5, 9:10]                           # [5,1]
    b2 = wk_ref[0:1, 10:11]                          # [1,1]
    w3 = w3_ref[:, 0:1]                              # [size,1]
    b3 = w3_ref[:, 1:2]                              # [size,1]

    def body(c, carry):
        off = pl.multiple_of(c * ch, 128)
        x = x_ref[:, pl.ds(off, ch)]                 # [8, ch] single lane-dense load

        # fc1: h1[o,b] = tanh(b1[o] + sum_k w1[o,k] * x[k,b]); K=8 VPU broadcast-MACs.
        acc1 = b1 + w1c[0] * x[0:1, :]
        for k in range(1, 8):
            acc1 = acc1 + w1c[k] * x[k:k + 1, :]
        h1 = jnp.tanh(acc1)                          # [5, ch], EUP

        # fc2: elementwise multiply + sublane reduce (XLU) + tanh (EUP).
        h2 = jnp.tanh(b2 + jnp.sum(w2 * h1, axis=0, keepdims=True))   # [1, ch]

        # fc3 outer product: out[o,b] = w3[o] * h2[0,b] + b3[o]; lane-dense store.
        o_ref[:, pl.ds(off, ch)] = w3 * h2 + b3      # [size, ch]
        return carry

    lax.fori_loop(0, n_chunks, body, 0)


def pack_params(w1, b1, w2, b2, w3, b3):
    """Pack PyTorch-layout params (w: [out,in], b: [out]) into two VMEM slabs."""
    assert w1.shape == (5, 8) and b1.shape == (5,), "fc1 must be Linear(8, 5)"
    assert w2.shape == (1, 5) and b2.shape == (1,), "fc2 must be Linear(5, 1)"
    assert w3.ndim == 2 and w3.shape[1] == 1 and b3.shape == (w3.shape[0],), \
        "fc3 must be Linear(1, size)"
    wk = jnp.zeros((8, 16), jnp.float32)
    wk = wk.at[0:5, 0:8].set(w1.astype(jnp.float32))    # w1 [5,8]
    wk = wk.at[0:5, 8].set(b1.astype(jnp.float32))      # b1 [5]
    wk = wk.at[0:5, 9].set(w2[0].astype(jnp.float32))   # w2 [1,5] -> column
    wk = wk.at[0, 10].set(b2[0].astype(jnp.float32))    # b2 scalar
    w3p = jnp.stack([w3[:, 0].astype(jnp.float32),
                     b3.astype(jnp.float32)], axis=1)   # [size, 2]
    return wk, w3p


def card_comparison_forward(p1_card, p1_color, p2_card, p2_color, packed, tb=None):
    """Pallas implementation of CardComparisonModel.forward. Returns [B, size]."""
    wk, w3p = packed
    size = w3p.shape[0]
    B = p1_card.shape[0]

    LANE = 128       # lane width: batch tiles must be multiples of this
    CH_MAX = 512     # inner-chunk width (vreg working set ~16-20 vregs)

    if tb is None:
        if B <= CH_MAX:
            tb = pl.cdiv(B, LANE) * LANE                    # one small tile
        else:
            # Big DMA blocks; cap so large batches keep >=2 grid steps (v7x 2-TC).
            tb = min(2048, pl.cdiv(B, CH_MAX) * CH_MAX)
    ch = min(CH_MAX, tb)
    assert tb % LANE == 0 and tb % ch == 0

    Bp = pl.cdiv(B, tb) * tb
    grid = Bp // tb

    # Single fused layout pass: concat features, put batch on the lane axis,
    # pad to the tile boundary -> one [8, Bp] slab (one input DMA per grid step).
    x = jnp.concatenate([p1_card, p1_color, p2_card, p2_color], axis=1)
    x = x.astype(jnp.float32).T                             # [8, B]
    if Bp != B:
        x = jnp.pad(x, ((0, 0), (0, Bp - B)))

    kernel = functools.partial(mlp_kernel, ch=ch)

    out_t = pl.pallas_call(
        kernel,
        out_shape=jax.ShapeDtypeStruct((size, Bp), jnp.float32),
        grid_spec=pltpu.PrefetchScalarGridSpec(
            num_scalar_prefetch=0,
            grid=(grid,),
            in_specs=[
                pl.BlockSpec((8, tb), lambda i: (0, i)),        # packed inputs
                pl.BlockSpec((8, 16), lambda i: (0, 0)),        # VMEM-resident weights
                pl.BlockSpec((size, 2), lambda i: (0, 0)),      # VMEM-resident w3/b3
            ],
            out_specs=pl.BlockSpec((size, tb), lambda i: (0, i)),
        ),
        compiler_params=pltpu.CompilerParams(
            dimension_semantics=("parallel",)),
    )(x, wk, w3p)

    # Back to the module's [B, size] layout (tiny: B*size*4 bytes).
    return out_t[:, :B].T


def init_params(key, size):
    """nn.Linear-style init; weights stored in PyTorch [out, in] layout."""
    l1, l2 = 5, 1
    ks = jax.random.split(key, 6)

    def lin(kw, kb, fan_in, fan_out):
        bound = 1.0 / jnp.sqrt(float(fan_in))
        w = jax.random.uniform(kw, (fan_out, fan_in), jnp.float32, -bound, bound)
        b = jax.random.uniform(kb, (fan_out,), jnp.float32, -bound, bound)
        return w, b

    w1, b1 = lin(ks[0], ks[1], 8, l1)
    w2, b2 = lin(ks[2], ks[3], l1, l2)
    w3, b3 = lin(ks[4], ks[5], l2, size)
    return (w1, b1, w2, b2, w3, b3)


def reference_forward(p1_card, p1_color, p2_card, p2_color, params):
    w1, b1, w2, b2, w3, b3 = params
    hi = jax.lax.Precision.HIGHEST
    x = jnp.concatenate([p1_card, p1_color, p2_card, p2_color], axis=1)
    x = jnp.tanh(jnp.dot(x, w1.T, precision=hi) + b1)
    x = jnp.tanh(jnp.dot(x, w2.T, precision=hi) + b2)
    return jnp.dot(x, w3.T, precision=hi) + b3


if __name__ == "__main__":
    key = jax.random.PRNGKey(0)
    k_params, k1, k2, k3 = jax.random.split(key, 4)

    size = 4        # output dim of fc3
    params = init_params(k_params, size)
    packed = pack_params(*params)

    def make_inputs(k, batch):
        ks = jax.random.split(k, 4)
        return [jax.random.normal(ks[i], (batch, 2), jnp.float32) for i in range(4)]

    # --- small batch: single 128-lane tile, single inner chunk ---
    batch = 8
    ins = make_inputs(k1, batch)
    out = jax.block_until_ready(card_comparison_forward(*ins, packed))
    ref = reference_forward(*ins, params)
    assert out.shape == (batch, size)
    assert jnp.allclose(out, ref, atol=1e-4, rtol=1e-4)

    # --- non-aligned medium batch: padding path, single grid step ---
    batch2 = 300
    ins2 = make_inputs(k2, batch2)
    out2 = jax.block_until_ready(card_comparison_forward(*ins2, packed))
    ref2 = reference_forward(*ins2, params)
    assert out2.shape == (batch2, size)
    assert jnp.allclose(out2, ref2, atol=1e-4, rtol=1e-4)

    # --- large batch: multi-step grid (tb=2048) + 512-lane inner chunk loop ---
    batch3 = 2500
    ins3 = make_inputs(k3, batch3)
    out3 = jax.block_until_ready(card_comparison_forward(*ins3, packed))
    ref3 = reference_forward(*ins3, params)
    assert out3.shape == (batch3, size)
    assert jnp.allclose(out3, ref3, atol=1e-4, rtol=1e-4)

    print("KERNEL_OK")
</pallas_src>

<mosaic_0001>
module attributes {stable_mosaic.version = 11 : i64} {
  func.func @mlp_kernel(%arg0: i32, %arg1: memref<8x128xf32, #tpu.memory_space<vmem>>, %arg2: memref<8x16xf32, #tpu.memory_space<vmem>>, %arg3: memref<4x2xf32, #tpu.memory_space<vmem>>, %arg4: memref<4x128xf32, #tpu.memory_space<vmem>>) attributes {dimension_semantics = [#tpu.dimension_semantics<parallel>], iteration_bounds = array<i64: 1>, scalar_prefetch = 0 : i64, scratch_operands = 0 : i64, tpu.core_type = #tpu.core_type<tc>, window_params = [{transform_indices = @transform_0, window_bounds = array<i64: 8, 128>}, {pipeline_mode = #tpu.pipeline_mode<synchronous>, transform_indices = @transform_1, window_bounds = array<i64: 8, 16>}, {pipeline_mode = #tpu.pipeline_mode<synchronous>, transform_indices = @transform_2, window_bounds = array<i64: 4, 2>}, {transform_indices = @transform_3, window_bounds = array<i64: 4, 128>}]} {
    %c0 = arith.constant 0 : index
    %c0_0 = arith.constant 0 : index
    %0 = vector.load %arg2[%c0, %c0_0] : memref<8x16xf32, #tpu.memory_space<vmem>>, vector<5x1xf32>
    %c0_1 = arith.constant 0 : index
    %c1 = arith.constant 1 : index
    %1 = vector.load %arg2[%c0_1, %c1] : memref<8x16xf32, #tpu.memory_space<vmem>>, vector<5x1xf32>
    %c0_2 = arith.constant 0 : index
    %c2 = arith.constant 2 : index
    %2 = vector.load %arg2[%c0_2, %c2] : memref<8x16xf32, #tpu.memory_space<vmem>>, vector<5x1xf32>
    %c0_3 = arith.constant 0 : index
    %c3 = arith.constant 3 : index
    %3 = vector.load %arg2[%c0_3, %c3] : memref<8x16xf32, #tpu.memory_space<vmem>>, vector<5x1xf32>
    %c0_4 = arith.constant 0 : index
    %c4 = arith.constant 4 : index
    %4 = vector.load %arg2[%c0_4, %c4] : memref<8x16xf32, #tpu.memory_space<vmem>>, vector<5x1xf32>
    %c0_5 = arith.constant 0 : index
    %c5 = arith.constant 5 : index
    %5 = vector.load %arg2[%c0_5, %c5] : memref<8x16xf32, #tpu.memory_space<vmem>>, vector<5x1xf32>
    %c0_6 = arith.constant 0 : index
    %c6 = arith.constant 6 : index
    %6 = vector.load %arg2[%c0_6, %c6] : memref<8x16xf32, #tpu.memory_space<vmem>>, vector<5x1xf32>
    %c0_7 = arith.constant 0 : index
    %c7 = arith.constant 7 : index
    %7 = vector.load %arg2[%c0_7, %c7] : memref<8x16xf32, #tpu.memory_space<vmem>>, vector<5x1xf32>
    %c0_8 = arith.constant 0 : index
    %c8 = arith.constant 8 : index
    %8 = vector.load %arg2[%c0_8, %c8] : memref<8x16xf32, #tpu.memory_space<vmem>>, vector<5x1xf32>
    %c0_9 = arith.constant 0 : index
    %c9 = arith.constant 9 : index
    %9 = vector.load %arg2[%c0_9, %c9] : memref<8x16xf32, #tpu.memory_space<vmem>>, vector<5x1xf32>
    %c0_10 = arith.constant 0 : index
    %c10 = arith.constant 10 : index
    %10 = vector.load %arg2[%c0_10, %c10] : memref<8x16xf32, #tpu.memory_space<vmem>>, vector<1x1xf32>
    %c0_11 = arith.constant 0 : index
    %c0_12 = arith.constant 0 : index
    %11 = vector.load %arg3[%c0_11, %c0_12] : memref<4x2xf32, #tpu.memory_space<vmem>>, vector<4x1xf32>
    %c0_13 = arith.constant 0 : index
    %c1_14 = arith.constant 1 : index
    %12 = vector.load %arg3[%c0_13, %c1_14] : memref<4x2xf32, #tpu.memory_space<vmem>>, vector<4x1xf32>
    %c0_i32 = arith.constant 0 : i32
    %c128_i32 = arith.constant 128 : i32
    %13 = arith.muli %c0_i32, %c128_i32 : i32
    %14 = tpu.assume_multiple %13, 128 : i32
    %c0_15 = arith.constant 0 : index
    %15 = arith.index_cast %14 : i32 to index
    %16 = vector.load %arg1[%c0_15, %15] : memref<8x128xf32, #tpu.memory_space<vmem>>, vector<8x128xf32>
    %17 = vector.extract_strided_slice %16 {offsets = [0, 0], sizes = [1, 128], strides = [1, 1]} : vector<8x128xf32> to vector<1x128xf32>
    %18 = vector.broadcast %0 : vector<5x1xf32> to vector<5x128xf32>
    %19 = vector.broadcast %17 : vector<1x128xf32> to vector<5x128xf32>
    %20 = arith.mulf %18, %19 : vector<5x128xf32>
    %21 = vector.broadcast %8 : vector<5x1xf32> to vector<5x128xf32>
    %22 = arith.addf %21, %20 : vector<5x128xf32>
    %23 = vector.extract_strided_slice %16 {offsets = [1, 0], sizes = [1, 128], strides = [1, 1]} : vector<8x128xf32> to vector<1x128xf32>
    %24 = vector.broadcast %1 : vector<5x1xf32> to vector<5x128xf32>
    %25 = vector.broadcast %23 : vector<1x128xf32> to vector<5x128xf32>
    %26 = arith.mulf %24, %25 : vector<5x128xf32>
    %27 = arith.addf %22, %26 : vector<5x128xf32>
    %28 = vector.extract_strided_slice %16 {offsets = [2, 0], sizes = [1, 128], strides = [1, 1]} : vector<8x128xf32> to vector<1x128xf32>
    %29 = vector.broadcast %2 : vector<5x1xf32> to vector<5x128xf32>
    %30 = vector.broadcast %28 : vector<1x128xf32> to vector<5x128xf32>
    %31 = arith.mulf %29, %30 : vector<5x128xf32>
    %32 = arith.addf %27, %31 : vector<5x128xf32>
    %33 = vector.extract_strided_slice %16 {offsets = [3, 0], sizes = [1, 128], strides = [1, 1]} : vector<8x128xf32> to vector<1x128xf32>
    %34 = vector.broadcast %3 : vector<5x1xf32> to vector<5x128xf32>
    %35 = vector.broadcast %33 : vector<1x128xf32> to vector<5x128xf32>
    %36 = arith.mulf %34, %35 : vector<5x128xf32>
    %37 = arith.addf %32, %36 : vector<5x128xf32>
    %38 = vector.extract_strided_slice %16 {offsets = [4, 0], sizes = [1, 128], strides = [1, 1]} : vector<8x128xf32> to vector<1x128xf32>
    %39 = vector.broadcast %4 : vector<5x1xf32> to vector<5x128xf32>
    %40 = vector.broadcast %38 : vector<1x128xf32> to vector<5x128xf32>
    %41 = arith.mulf %39, %40 : vector<5x128xf32>
    %42 = arith.addf %37, %41 : vector<5x128xf32>
    %43 = vector.extract_strided_slice %16 {offsets = [5, 0], sizes = [1, 128], strides = [1, 1]} : vector<8x128xf32> to vector<1x128xf32>
    %44 = vector.broadcast %5 : vector<5x1xf32> to vector<5x128xf32>
    %45 = vector.broadcast %43 : vector<1x128xf32> to vector<5x128xf32>
    %46 = arith.mulf %44, %45 : vector<5x128xf32>
    %47 = arith.addf %42, %46 : vector<5x128xf32>
    %48 = vector.extract_strided_slice %16 {offsets = [6, 0], sizes = [1, 128], strides = [1, 1]} : vector<8x128xf32> to vector<1x128xf32>
    %49 = vector.broadcast %6 : vector<5x1xf32> to vector<5x128xf32>
    %50 = vector.broadcast %48 : vector<1x128xf32> to vector<5x128xf32>
    %51 = arith.mulf %49, %50 : vector<5x128xf32>
    %52 = arith.addf %47, %51 : vector<5x128xf32>
    %53 = vector.extract_strided_slice %16 {offsets = [7, 0], sizes = [1, 128], strides = [1, 1]} : vector<8x128xf32> to vector<1x128xf32>
    %54 = vector.broadcast %7 : vector<5x1xf32> to vector<5x128xf32>
    %55 = vector.broadcast %53 : vector<1x128xf32> to vector<5x128xf32>
    %56 = arith.mulf %54, %55 : vector<5x128xf32>
    %57 = arith.addf %52, %56 : vector<5x128xf32>
    %58 = math.tanh %57 : vector<5x128xf32>
    %59 = vector.broadcast %9 : vector<5x1xf32> to vector<5x128xf32>
    %60 = arith.mulf %59, %58 : vector<5x128xf32>
    %cst = arith.constant dense<0.000000e+00> : vector<128xf32>
    %61 = vector.multi_reduction <add>, %60, %cst [0] : vector<5x128xf32> to vector<128xf32>
    %62 = vector.shape_cast %61 : vector<128xf32> to vector<1x128xf32>
    %63 = vector.broadcast %10 : vector<1x1xf32> to vector<1x128xf32>
    %64 = arith.addf %63, %62 : vector<1x128xf32>
    %65 = math.tanh %64 : vector<1x128xf32>
    %66 = vector.broadcast %11 : vector<4x1xf32> to vector<4x128xf32>
    %67 = vector.broadcast %65 : vector<1x128xf32> to vector<4x128xf32>
    %68 = arith.mulf %66, %67 : vector<4x128xf32>
    %69 = vector.broadcast %12 : vector<4x1xf32> to vector<4x128xf32>
    %70 = arith.addf %68, %69 : vector<4x128xf32>
    %c0_16 = arith.constant 0 : index
    %71 = arith.index_cast %14 : i32 to index
    %72 = vector.load %arg4[%c0_16, %71] : memref<4x128xf32, #tpu.memory_space<vmem>>, vector<4x128xf32>
    tpu.vector_store %arg4[%c0_16, %71], %70 {strides = array<i32>} : memref<4x128xf32, #tpu.memory_space<vmem>>, vector<4x128xf32>,
    %c1_i32 = arith.constant 1 : i32
    return
  }
  func.func @transform_0(%arg0: i32) -> (i32, i32) {
    %c0_i32 = arith.constant 0 : i32
    %c0_i32_0 = arith.constant 0 : i32
    return %c0_i32, %arg0 : i32, i32
  }
  func.func @transform_1(%arg0: i32) -> (i32, i32) {
    %c0_i32 = arith.constant 0 : i32
    %c0_i32_0 = arith.constant 0 : i32
    %c0_i32_1 = arith.constant 0 : i32
    return %c0_i32, %c0_i32_0 : i32, i32
  }
  func.func @transform_2(%arg0: i32) -> (i32, i32) {
    %c0_i32 = arith.constant 0 : i32
    %c0_i32_0 = arith.constant 0 : i32
    %c0_i32_1 = arith.constant 0 : i32
    return %c0_i32, %c0_i32_0 : i32, i32
  }
  func.func @transform_3(%arg0: i32) -> (i32, i32) {
    %c0_i32 = arith.constant 0 : i32
    %c0_i32_0 = arith.constant 0 : i32
    return %c0_i32, %arg0 : i32, i32
  }
}

</mosaic_0001>

<llo_original>
// kernel: tpu_custom_call.1
$region0: #{tpu_custom_call.1}
  #allocation0 [shape = 'u32[]', space=smem, size = 0x4, offset = 0x4, fixed_abs, tag = 'smem constant byte address 0x4 - core index']
  #allocation1 [shape = 'u32[144,128]{1,0:T(1,128)}', space=vmem, size = 0x12000, scoped, tag = 'internal scratch']
  %s0 = inlined_call_operand.hbm [shape: f32[8,128], index: 0, kind: input, shape index: {}]
  %s1 = inlined_call_operand.vmem [shape: f32[8,16], index: 1, kind: input, shape index: {}]
  %s2 = inlined_call_operand.vmem [shape: f32[4,2], index: 2, kind: input, shape index: {}]
  %s3 = inlined_call_operand.hbm [shape: f32[4,128], index: 3, kind: output, shape index: {}]
  %s4 = sld [smem:[#allocation0]]
  $region26: #{tpu_custom_call.1} parent=0
    _
  %s6 = ssub.s32 1, %s4
  %s7 = scalar_select 0, %s6, %s4
  $region1: #{tpu_custom_call.1} parent=0
    #allocation2 [shape = 'u8[4096]{0}', space=vmem, size = 0x1000, scoped, tag = 'input window, operand 0, single buffered']
    #allocation3 [shape = 's32[1]{0}', space=sflag, size = 0x4, scoped, tag = 'scoped memory for tpu_custom_call.1']
    #allocation4 [shape = 's32[1]{0}', space=sflag, size = 0x4, scoped, tag = 'scoped memory for tpu_custom_call.1']
    #allocation5 [shape = 'u8[2048]{0}', space=vmem, size = 0x800, scoped, tag = 'output window, operand 0, single buffered']
    %8 = vsyncpa [#allocation3], 0
    %9 = vsyncpa [#allocation4], 0
    // Predicated region
    $region2: #{tpu_custom_call.1} parent=1 // pred_check
      _
    $region3: #{tpu_custom_call.1} parent=1 // pred_check_branch
      %11 = sbr.rel (0) target = $region5
    $region4: #{tpu_custom_call.1} parent=1 // pred_region
      %s13 = ssub.s32 128, 128
      %14 = vsyncadd [#allocation3], %s13
      %s16 = sshll.u32 [#allocation2], 4
      %s17 = int_to_ptr.vmem [resolvable:$true] %s16
      %19 = dma.hbm_to_vmem [thread:$0]  %s0, 128, %s17, [#allocation3]
    $region5: #{tpu_custom_call.1} parent=1 // pred_fallthru
      _
    // Predicated region
    $region6: #{tpu_custom_call.1} parent=1 // pred_check
      _
    $region7: #{tpu_custom_call.1} parent=1 // pred_check_branch
      %21 = sbr.rel (0) target = $region9
    $region8: #{tpu_custom_call.1} parent=1 // pred_region
      _
    $region9: #{tpu_custom_call.1} parent=1 // pred_fallthru
      _
    // Predicated region
    $region10: #{tpu_custom_call.1} parent=1 // pred_check
      _
    $region11: #{tpu_custom_call.1} parent=1 // pred_check_branch
      %23 = sbr.rel (0) target = $region13
    $region12: #{tpu_custom_call.1} parent=1 // pred_region
      _
    $region13: #{tpu_custom_call.1} parent=1 // pred_fallthru
      _
    // Predicated region
    $region14: #{tpu_custom_call.1} parent=1 // pred_check
      _
    $region15: #{tpu_custom_call.1} parent=1 // pred_check_branch
      %25 = sbr.rel (0) target = $region17
    $region16: #{tpu_custom_call.1} parent=1 // pred_region
      %26 = dma.done [#allocation3], 128
    $region17: #{tpu_custom_call.1} parent=1 // pred_fallthru
      _
    %v27 = vld [vmem:[%s1] sm:$0x1f]
    %v28 = vld [vmem:[%s1] sm:$0x1]
    %v29 = vld [vmem:[%s2] sm:$0xf]
    %v30 = vld [vmem:[#allocation2] sm:$0xff]
    %32 = vset.pattern.permute.xlu0 0
    %33 = vperm.xlu0 %32, %v27
    %v34 = vpop.permute.xlu0 %33
    %v36 = vlaneseq
    %v37 = vshrl.u32 %v36, 7
    %v38 = vsub.s32 0, %v37
    %v39 = vrot.slane %v30, %v38
    %v40 = vmul.f32 %v34, %v39
    %41 = vset.pattern.permute.xlu0 8
    %42 = vperm.xlu0 %41, %v27
    %v43 = vpop.permute.xlu0 %42
    %v45 = vadd.f32 %v43, %v40
    %46 = vset.pattern.permute.xlu0 1
    %47 = vperm.xlu0 %46, %v27
    %v48 = vpop.permute.xlu0 %47
    %v50 = vlaneseq
    %v51 = vshrl.u32 %v50, 7
    %v52 = vsub.s32 1, %v51
    %v53 = vrot.slane %v30, %v52
    %v54 = vmul.f32 %v48, %v53
    %v55 = vadd.f32 %v45, %v54
    %56 = vset.pattern.permute.xlu0 2
    %57 = vperm.xlu0 %56, %v27
    %v58 = vpop.permute.xlu0 %57
    %v60 = vlaneseq
    %v61 = vshrl.u32 %v60, 7
    %v62 = vsub.s32 2, %v61
    %v63 = vrot.slane %v30, %v62
    %v64 = vmul.f32 %v58, %v63
    %v65 = vadd.f32 %v55, %v64
    %66 = vset.pattern.permute.xlu0 3
    %67 = vperm.xlu0 %66, %v27
    %v68 = vpop.permute.xlu0 %67
    %v70 = vlaneseq
    %v71 = vshrl.u32 %v70, 7
    %v72 = vsub.s32 3, %v71
    %v73 = vrot.slane %v30, %v72
    %v74 = vmul.f32 %v68, %v73
    %v75 = vadd.f32 %v65, %v74
    %76 = vset.pattern.permute.xlu0 4
    %77 = vperm.xlu0 %76, %v27
    %v78 = vpop.permute.xlu0 %77
    %v80 = vlaneseq
    %v81 = vshrl.u32 %v80, 7
    %v82 = vsub.s32 4, %v81
    %v83 = vrot.slane %v30, %v82
    %v84 = vmul.f32 %v78, %v83
    %v85 = vadd.f32 %v75, %v84
    %86 = vset.pattern.permute.xlu0 5
    %87 = vperm.xlu0 %86, %v27
    %v88 = vpop.permute.xlu0 %87
    %v90 = vlaneseq
    %v91 = vshrl.u32 %v90, 7
    %v92 = vsub.s32 5, %v91
    %v93 = vrot.slane %v30, %v92
    %v94 = vmul.f32 %v88, %v93
    %v95 = vadd.f32 %v85, %v94
    %96 = vset.pattern.permute.xlu0 6
    %97 = vperm.xlu0 %96, %v27
    %v98 = vpop.permute.xlu0 %97
    %v100 = vlaneseq
    %v101 = vshrl.u32 %v100, 7
    %v102 = vsub.s32 6, %v101
    %v103 = vrot.slane %v30, %v102
    %v104 = vmul.f32 %v98, %v103
    %v105 = vadd.f32 %v95, %v104
    %106 = vset.pattern.permute.xlu0 7
    %107 = vperm.xlu0 %106, %v27
    %v108 = vpop.permute.xlu0 %107
    %v110 = vlaneseq
    %v111 = vshrl.u32 %v110, 7
    %v112 = vsub.s32 7, %v111
    %v113 = vrot.slane %v30, %v112
    %v114 = vmul.f32 %v108, %v113
    %v115 = vadd.f32 %v105, %v114
    %v116 = vtanh.pop %v115
    %117 = vset.pattern.permute.xlu0 9
    %118 = vperm.xlu0 %117, %v27
    %v119 = vpop.permute.xlu0 %118
    %v121 = vmul.f32 %v119, %v116
    %vm122 = vcmask 1044480
    %v123 = vsel %vm122, %v121, 0.0
    %v124 = vrot.slane %v123, 4
    %v125 = vadd.f32 %v123, %v124
    %v126 = vrot.slane %v125, 2
    %v127 = vadd.f32 %v125, %v126
    %v128 = vrot.slane %v127, 1
    %v129 = vadd.f32 %v127, %v128
    %131 = vset.pattern.permute.xlu0 10
    %132 = vperm.xlu0 %131, %v28
    %v133 = vpop.permute.xlu0 %132
    %v135 = vadd.f32 %v133, %v129
    %v136 = vtanh.pop %v135
    %138 = vset.pattern.permute.xlu0 0
    %139 = vperm.xlu0 %138, %v29
    %v140 = vpop.permute.xlu0 %139
    %v142 = vlaneseq
    %v143 = vshrl.u32 %v142, 7
    %v144 = vsub.s32 0, %v143
    %v145 = vrot.slane %v136, %v144
    %v146 = vmul.f32 %v140, %v145
    %147 = vset.pattern.permute.xlu0 1
    %148 = vperm.xlu0 %147, %v29
    %v149 = vpop.permute.xlu0 %148
    %v151 = vadd.f32 %v146, %v149
    %152 = vst [vmem:[#allocation5] sm:$0xf] %v151
    // Predicated region
    $region18: #{tpu_custom_call.1} parent=1 // pred_check
      _
    $region19: #{tpu_custom_call.1} parent=1 // pred_check_branch
      %154 = sbr.rel (0) target = $region21
    $region20: #{tpu_custom_call.1} parent=1 // pred_region
      %s156 = ssub.s32 64, 64
      %157 = vsyncadd [#allocation4], %s156
      %s159 = sshll.u32 [#allocation5], 4
      %s160 = int_to_ptr.vmem [resolvable:$true] %s159
      %162 = dma.vmem_to_hbm [thread:$0]  %s160, 64, %s3, [#allocation4]
    $region21: #{tpu_custom_call.1} parent=1 // pred_fallthru
      _
    // Predicated region
    $region22: #{tpu_custom_call.1} parent=1 // pred_check
      _
    $region23: #{tpu_custom_call.1} parent=1 // pred_check_branch
      %164 = sbr.rel (0) target = $region25
    $region24: #{tpu_custom_call.1} parent=1 // pred_region
      %165 = dma.done [#allocation4], 64
    $region25: #{tpu_custom_call.1} parent=1 // pred_fallthru
      _
    %166 = vsyncpa [#allocation3], 1
    %167 = vsyncpa [#allocation4], 1

</llo_original>
